<compile_context>
chip_gen: v7x
topology: tpu7x:2x2x1
jax: 0.10.0
libtpu: 0.0.40
codegen_flags: <defaults>
</compile_context>

<pallas_src>
import functools

import jax
import jax.numpy as jnp
from jax import lax
from jax.experimental import pallas as pl
from jax.experimental.pallas import tpu as pltpu

HIDDEN = 128
LANES = 128


def _round_up(x, m):
    return ((x + m - 1) // m) * m


def _bf16_vpu_available():
    """bf16 elementwise is native on v6e/v7x; v5e (v5 lite) and older are not."""
    try:
        kind = jax.devices()[0].device_kind.lower()
    except Exception:
        return True
    return not any(tag in kind for tag in ("v2", "v3", "v4", "v5"))


def _value_kernel(x_ref, w1_ref, b1_ref, w2_ref, b2_ref, w3_ref, b3_ref, o_ref,
                  *, sub):
    """One batch tile: (fc1+ReLU) -> (fc2+ReLU) -> fc3, in `sub`-row sub-blocks."""
    tb = x_ref.shape[0]
    n_sub = tb // sub
    out_rows = sub // LANES

    # Grid-constant operands (resident in VMEM across grid steps).
    w1 = w1_ref[...]          # (S, 128)   bf16  (MXU)
    b1 = b1_ref[...]          # (1, 128)   epilogue dtype
    w2 = w2_ref[...]          # (128, 128) bf16  (MXU)
    b2 = b2_ref[...]          # (1, 128)   epilogue dtype
    w3 = w3_ref[...]          # (1, 128)   epilogue dtype (VPU)
    b3 = b3_ref[0]            # f32 scalar (SMEM)

    def body(j, carry):
        r0 = pl.multiple_of(j * sub, LANES)
        xs = x_ref[pl.ds(r0, sub), :]                               # (sub, S) bf16

        # fc1 + ReLU: bf16 MXU operands, f32 accumulation, epilogue-dtype elementwise.
        h1 = jnp.dot(xs, w1, preferred_element_type=jnp.float32)
        h1 = jnp.maximum(h1.astype(b1.dtype) + b1, 0).astype(jnp.bfloat16)

        # fc2 + ReLU.
        h2 = jnp.dot(h1, w2, preferred_element_type=jnp.float32)
        h2 = jnp.maximum(h2.astype(b2.dtype) + b2, 0)               # (sub, 128)

        # fc3 (128 -> 1): VPU multiply + cross-lane reduce, f32 accumulation.
        val = jnp.sum(h2 * w3, axis=-1, keepdims=True,
                      dtype=jnp.float32) + b3                        # (sub, 1) f32

        # Lane-dense store: (sub, 1) -> (sub//128, 128) rows of full 128-lane vst.
        o0 = pl.multiple_of(j * out_rows, out_rows)
        o_ref[pl.ds(o0, out_rows), :] = (
            val.reshape(out_rows, LANES).astype(o_ref.dtype))
        return carry

    lax.fori_loop(0, n_sub, body, 0, unroll=True)


@functools.partial(jax.jit, static_argnames=("max_tb",))
def value_forward(state, params, *, max_tb=2048):
    """state: (B, state_dim) float32 -> (B, 1) float32."""
    w1, b1, w2, b2, w3, b3 = params
    B, S = state.shape

    epi_dtype = jnp.bfloat16 if _bf16_vpu_available() else jnp.float32

    # ---- Batch tiling ------------------------------------------------------
    # Output blocks are (tb//128, 128), so tb must be a multiple of 128; when the
    # grid has >1 step we also keep tb a multiple of 1024 so tb//128 >= 8
    # (tile-aligned output blocks).  For B >= 2048 we force >= 2 grid steps so the
    # "parallel" batch axis can shard across both TensorCores on v7x.
    B128 = _round_up(B, LANES)
    if B128 < 2048:
        tb = B128                                   # single tile, grid = 1
    else:
        tb = min(max(max_tb, 1024), 1024 * max(1, B128 // 2048))
    B_pad = _round_up(B, tb)

    # Sub-block size (rows) inside a tile: prefer ~512, must divide tb.
    sub = next(s for s in (512, 384, 256, 128) if tb % s == 0)

    # ---- Operand preparation (wrapper-side casts) --------------------------
    x = state.astype(jnp.bfloat16)                  # halve x HBM stream / VMEM buf
    if B_pad != B:
        x = jnp.pad(x, ((0, B_pad - B), (0, 0)))

    w1c = w1.astype(jnp.bfloat16)                   # MXU operands
    w2c = w2.astype(jnp.bfloat16)
    b1c = b1.astype(epi_dtype)                      # epilogue operands
    b2c = b2.astype(epi_dtype)
    w3c = w3.astype(epi_dtype)

    # ---- Cost hint for XLA scheduling --------------------------------------
    epi_bytes = jnp.dtype(epi_dtype).itemsize
    flops = 2 * B_pad * (S * HIDDEN + HIDDEN * HIDDEN + HIDDEN)
    bytes_accessed = (
        B_pad * S * 2                               # x (bf16)
        + B_pad * 4                                 # output (f32)
        + (S * HIDDEN + HIDDEN * HIDDEN) * 2        # w1, w2 (bf16)
        + 3 * HIDDEN * epi_bytes + 4)               # b1, b2, w3, b3

    const = lambda i: (0, 0)                        # resident weight/bias blocks

    out = pl.pallas_call(
        functools.partial(_value_kernel, sub=sub),
        out_shape=jax.ShapeDtypeStruct((B_pad // LANES, LANES), jnp.float32),
        grid=(B_pad // tb,),
        in_specs=[
            pl.BlockSpec((tb, S), lambda i: (i, 0)),              # x tile (streamed)
            pl.BlockSpec((S, HIDDEN), const),                     # w1 (bf16)
            pl.BlockSpec((1, HIDDEN), const),                     # b1
            pl.BlockSpec((HIDDEN, HIDDEN), const),                # w2 (bf16)
            pl.BlockSpec((1, HIDDEN), const),                     # b2
            pl.BlockSpec((1, HIDDEN), const),                     # w3 row
            pl.BlockSpec(memory_space=pltpu.MemorySpace.SMEM),    # b3 scalar
        ],
        out_specs=pl.BlockSpec((tb // LANES, LANES), lambda i: (i, 0)),
        compiler_params=pltpu.CompilerParams(
            dimension_semantics=("parallel",),
        ),
        cost_estimate=pl.CostEstimate(
            flops=flops, transcendentals=0, bytes_accessed=bytes_accessed),
    )(x, w1c, b1c, w2c, b2c, w3c, b3)

    # Lane-dense (B_pad//128, 128) -> (B, 1).
    return out.reshape(B_pad, 1)[:B]


def init_params(key, state_dim, hidden=HIDDEN):
    """Deterministic init mimicking nn.Linear default (uniform +/- 1/sqrt(fan_in)).
    Weights stored transposed: (in_features, out_features); fc3 weight stored as a
    (1, hidden) row (VPU reduction) and its bias as a (1,) vector (SMEM scalar)."""
    ks = jax.random.split(key, 6)

    def linear(kw, kb, fan_in, fan_out):
        bound = 1.0 / jnp.sqrt(jnp.float32(fan_in))
        w = jax.random.uniform(kw, (fan_in, fan_out), jnp.float32, -bound, bound)
        b = jax.random.uniform(kb, (1, fan_out), jnp.float32, -bound, bound)
        return w, b

    w1, b1 = linear(ks[0], ks[1], state_dim, hidden)
    w2, b2 = linear(ks[2], ks[3], hidden, hidden)
    w3, b3 = linear(ks[4], ks[5], hidden, 1)
    return (w1, b1, w2, b2, w3.reshape(1, hidden), b3.reshape(1))


def value_ref(state, params):
    """Pure-JAX f32 reference (PyTorch semantics) for correctness check."""
    w1, b1, w2, b2, w3, b3 = params
    h = jnp.maximum(state @ w1 + b1, 0.0)
    h = jnp.maximum(h @ w2 + b2, 0.0)
    return jnp.sum(h * w3, axis=-1, keepdims=True) + b3[0]


if __name__ == "__main__":
    key = jax.random.PRNGKey(0)
    k_param, k_state = jax.random.split(key)

    batch = 8
    state_dim = 32

    params = init_params(k_param, state_dim)
    state = jax.random.normal(k_state, (batch, state_dim), dtype=jnp.float32)

    out = jax.block_until_ready(value_forward(state, params))
    ref = value_ref(state, params)
    assert out.shape == (batch, 1), out.shape
    # bf16 MXU operands / bf16 x (f32 accumulation) -> loosened tolerance vs f32 ref.
    assert jnp.allclose(out, ref, atol=5e-2, rtol=5e-2), \
        float(jnp.max(jnp.abs(out - ref)))

    # Exercise a multi-step batch grid + tail padding (B not a multiple of tb).
    big_state = jax.random.normal(jax.random.PRNGKey(1), (2500, state_dim), jnp.float32)
    big_out = jax.block_until_ready(value_forward(big_state, params))
    big_ref = value_ref(big_state, params)
    assert big_out.shape == (2500, 1), big_out.shape
    assert jnp.allclose(big_out, big_ref, atol=5e-2, rtol=5e-2), \
        float(jnp.max(jnp.abs(big_out - big_ref)))

    print("KERNEL_OK")
</pallas_src>

<mosaic_0001>
module attributes {stable_mosaic.version = 11 : i64} {
  func.func @_value_kernel(%arg0: i32, %arg1: memref<128x32xbf16, #tpu.memory_space<vmem>>, %arg2: memref<32x128xbf16, #tpu.memory_space<vmem>>, %arg3: memref<1x128xbf16, #tpu.memory_space<vmem>>, %arg4: memref<128x128xbf16, #tpu.memory_space<vmem>>, %arg5: memref<1x128xbf16, #tpu.memory_space<vmem>>, %arg6: memref<1x128xbf16, #tpu.memory_space<vmem>>, %arg7: memref<1xf32, #tpu.memory_space<smem>>, %arg8: memref<1x128xf32, #tpu.memory_space<vmem>>) attributes {dimension_semantics = [#tpu.dimension_semantics<parallel>], iteration_bounds = array<i64: 1>, scalar_prefetch = 0 : i64, scratch_operands = 0 : i64, tpu.core_type = #tpu.core_type<tc>, window_params = [{transform_indices = @transform_0, window_bounds = array<i64: 128, 32>}, {pipeline_mode = #tpu.pipeline_mode<synchronous>, transform_indices = @transform_1, window_bounds = array<i64: 32, 128>}, {pipeline_mode = #tpu.pipeline_mode<synchronous>, transform_indices = @transform_2, window_bounds = array<i64: 1, 128>}, {pipeline_mode = #tpu.pipeline_mode<synchronous>, transform_indices = @transform_3, window_bounds = array<i64: 128, 128>}, {pipeline_mode = #tpu.pipeline_mode<synchronous>, transform_indices = @transform_4, window_bounds = array<i64: 1, 128>}, {pipeline_mode = #tpu.pipeline_mode<synchronous>, transform_indices = @transform_5, window_bounds = array<i64: 1, 128>}, {transform_indices = @transform_6, window_bounds = array<i64: 1>}, {transform_indices = @transform_7, window_bounds = array<i64: 1, 128>}]} {
    %c0 = arith.constant 0 : index
    %c0_0 = arith.constant 0 : index
    %0 = vector.load %arg2[%c0, %c0_0] : memref<32x128xbf16, #tpu.memory_space<vmem>>, vector<32x128xbf16>
    %c0_1 = arith.constant 0 : index
    %c0_2 = arith.constant 0 : index
    %1 = vector.load %arg3[%c0_1, %c0_2] : memref<1x128xbf16, #tpu.memory_space<vmem>>, vector<1x128xbf16>
    %c0_3 = arith.constant 0 : index
    %c0_4 = arith.constant 0 : index
    %2 = vector.load %arg4[%c0_3, %c0_4] : memref<128x128xbf16, #tpu.memory_space<vmem>>, vector<128x128xbf16>
    %c0_5 = arith.constant 0 : index
    %c0_6 = arith.constant 0 : index
    %3 = vector.load %arg5[%c0_5, %c0_6] : memref<1x128xbf16, #tpu.memory_space<vmem>>, vector<1x128xbf16>
    %c0_7 = arith.constant 0 : index
    %c0_8 = arith.constant 0 : index
    %4 = vector.load %arg6[%c0_7, %c0_8] : memref<1x128xbf16, #tpu.memory_space<vmem>>, vector<1x128xbf16>
    %c0_9 = arith.constant 0 : index
    %5 = memref.load %arg7[%c0_9] : memref<1xf32, #tpu.memory_space<smem>>
    %c0_i32 = arith.constant 0 : i32
    %c128_i32 = arith.constant 128 : i32
    %6 = arith.muli %c0_i32, %c128_i32 : i32
    %7 = tpu.assume_multiple %6, 128 : i32
    %8 = arith.index_cast %7 : i32 to index
    %c0_10 = arith.constant 0 : index
    %9 = vector.load %arg1[%8, %c0_10] : memref<128x32xbf16, #tpu.memory_space<vmem>>, vector<128x32xbf16>
    %cst = arith.constant dense<0.000000e+00> : vector<128x128xf32>
    %10 = tpu.matmul %9, %0, %cst {dimension_numbers = #tpu.dot_dimension_numbers<[1], [0], [0], [1], [0, 0, 1, 1], [], []>} : vector<128x32xbf16>, vector<32x128xbf16>, vector<128x128xf32> -> vector<128x128xf32>
    %11 = arith.truncf %10 : vector<128x128xf32> to vector<128x128xbf16>
    %12 = vector.broadcast %1 : vector<1x128xbf16> to vector<128x128xbf16>
    %13 = arith.addf %11, %12 : vector<128x128xbf16>
    %cst_11 = arith.constant 0.000000e+00 : bf16
    %14 = vector.broadcast %cst_11 : bf16 to vector<128x128xbf16>
    %15 = arith.maximumf %13, %14 : vector<128x128xbf16>
    %cst_12 = arith.constant dense<0.000000e+00> : vector<128x128xf32>
    %16 = tpu.matmul %15, %2, %cst_12 {dimension_numbers = #tpu.dot_dimension_numbers<[1], [0], [0], [1], [0, 0, 1, 1], [], []>} : vector<128x128xbf16>, vector<128x128xbf16>, vector<128x128xf32> -> vector<128x128xf32>
    %17 = arith.truncf %16 : vector<128x128xf32> to vector<128x128xbf16>
    %18 = vector.broadcast %3 : vector<1x128xbf16> to vector<128x128xbf16>
    %19 = arith.addf %17, %18 : vector<128x128xbf16>
    %cst_13 = arith.constant 0.000000e+00 : bf16
    %20 = vector.broadcast %cst_13 : bf16 to vector<128x128xbf16>
    %21 = arith.maximumf %19, %20 : vector<128x128xbf16>
    %22 = vector.broadcast %4 : vector<1x128xbf16> to vector<128x128xbf16>
    %23 = arith.mulf %21, %22 : vector<128x128xbf16>
    %24 = arith.extf %23 : vector<128x128xbf16> to vector<128x128xf32>
    %cst_14 = arith.constant dense<0.000000e+00> : vector<128xf32>
    %25 = vector.multi_reduction <add>, %24, %cst_14 [1] : vector<128x128xf32> to vector<128xf32>
    %26 = vector.shape_cast %25 : vector<128xf32> to vector<128x1xf32>
    %27 = vector.broadcast %5 : f32 to vector<128x1xf32>
    %28 = arith.addf %26, %27 : vector<128x1xf32>
    %c1_i32 = arith.constant 1 : i32
    %29 = arith.muli %c0_i32, %c1_i32 : i32
    %30 = tpu.assume_multiple %29, 1 : i32
    %31 = vector.shape_cast %28 : vector<128x1xf32> to vector<1x128xf32>
    %32 = arith.index_cast %30 : i32 to index
    %c0_15 = arith.constant 0 : index
    %33 = vector.load %arg8[%32, %c0_15] : memref<1x128xf32, #tpu.memory_space<vmem>>, vector<1x128xf32>
    tpu.vector_store %arg8[%32, %c0_15], %31 {strides = array<i32>} : memref<1x128xf32, #tpu.memory_space<vmem>>, vector<1x128xf32>,
    %c1_i32_16 = arith.constant 1 : i32
    return
  }
  func.func @transform_0(%arg0: i32) -> (i32, i32) {
    %c0_i32 = arith.constant 0 : i32
    %c0_i32_0 = arith.constant 0 : i32
    return %arg0, %c0_i32 : i32, i32
  }
  func.func @transform_1(%arg0: i32) -> (i32, i32) {
    %c0_i32 = arith.constant 0 : i32
    %c0_i32_0 = arith.constant 0 : i32
    %c0_i32_1 = arith.constant 0 : i32
    return %c0_i32, %c0_i32_0 : i32, i32
  }
  func.func @transform_2(%arg0: i32) -> (i32, i32) {
    %c0_i32 = arith.constant 0 : i32
    %c0_i32_0 = arith.constant 0 : i32
    %c0_i32_1 = arith.constant 0 : i32
    return %c0_i32, %c0_i32_0 : i32, i32
  }
  func.func @transform_3(%arg0: i32) -> (i32, i32) {
    %c0_i32 = arith.constant 0 : i32
    %c0_i32_0 = arith.constant 0 : i32
    %c0_i32_1 = arith.constant 0 : i32
    return %c0_i32, %c0_i32_0 : i32, i32
  }
  func.func @transform_4(%arg0: i32) -> (i32, i32) {
    %c0_i32 = arith.constant 0 : i32
    %c0_i32_0 = arith.constant 0 : i32
    %c0_i32_1 = arith.constant 0 : i32
    return %c0_i32, %c0_i32_0 : i32, i32
  }
  func.func @transform_5(%arg0: i32) -> (i32, i32) {
    %c0_i32 = arith.constant 0 : i32
    %c0_i32_0 = arith.constant 0 : i32
    %c0_i32_1 = arith.constant 0 : i32
    return %c0_i32, %c0_i32_0 : i32, i32
  }
  func.func @transform_6(%arg0: i32) -> i32 {
    %c0_i32 = arith.constant 0 : i32
    %c0_i32_0 = arith.constant 0 : i32
    return %c0_i32 : i32
  }
  func.func @transform_7(%arg0: i32) -> (i32, i32) {
    %c0_i32 = arith.constant 0 : i32
    %c0_i32_0 = arith.constant 0 : i32
    return %arg0, %c0_i32 : i32, i32
  }
}

</mosaic_0001>

<llo_original>
// kernel: value_forward.1
$region0: #{value_forward.1}
  #allocation0 [shape = 'u32[]', space=smem, size = 0x4, offset = 0x4, fixed_abs, tag = 'smem constant byte address 0x4 - core index']
  #allocation1 [shape = 'u32[144,128]{1,0:T(1,128)}', space=vmem, size = 0x12000, scoped, tag = 'internal scratch']
  #allocation2 [shape = 'f32[1]{0:T(128)S(6)}', space=smem, size = 0x200, scoped, tag = 'scoped memory for value_forward.1']
  %s0 = inlined_call_operand.vmem [shape: bf16[128,32], index: 0, kind: input, shape index: {}]
  %s1 = inlined_call_operand.vmem [shape: bf16[32,128], index: 1, kind: input, shape index: {}]
  %s2 = inlined_call_operand.vmem [shape: bf16[1,128], index: 2, kind: input, shape index: {}]
  %s3 = inlined_call_operand.vmem [shape: bf16[128,128], index: 3, kind: input, shape index: {}]
  %s4 = inlined_call_operand.vmem [shape: bf16[1,128], index: 4, kind: input, shape index: {}]
  %s5 = inlined_call_operand.vmem [shape: bf16[1,128], index: 5, kind: input, shape index: {}]
  %s6 = inlined_call_operand.<no memory space> [shape: f32[1], index: 6, kind: input, shape index: {}]
  %s7 = inlined_call_operand.vmem [shape: f32[1,128], index: 7, kind: output, shape index: {}]
  %s8 = sld [smem:[#allocation0]]
  $region38: #{value_forward.1} parent=0
    _
  %s10 = ssub.s32 1, %s8
  %s11 = scalar_select 0, %s10, %s8
  %12 = sst [smem:[#allocation2]] %s6
  // Predicated region
  $region2: #{value_forward.1} parent=0 // pred_check
    _
  $region3: #{value_forward.1} parent=0 // pred_check_branch
    %14 = sbr.rel (0) target = $region5
  $region4: #{value_forward.1} parent=0 // pred_region
    _
  $region5: #{value_forward.1} parent=0 // pred_fallthru
    _
  // Predicated region
  $region6: #{value_forward.1} parent=0 // pred_check
    _
  $region7: #{value_forward.1} parent=0 // pred_check_branch
    %16 = sbr.rel (0) target = $region9
  $region8: #{value_forward.1} parent=0 // pred_region
    _
  $region9: #{value_forward.1} parent=0 // pred_fallthru
    _
  // Predicated region
  $region10: #{value_forward.1} parent=0 // pred_check
    _
  $region11: #{value_forward.1} parent=0 // pred_check_branch
    %18 = sbr.rel (0) target = $region13
  $region12: #{value_forward.1} parent=0 // pred_region
    _
  $region13: #{value_forward.1} parent=0 // pred_fallthru
    _
  // Predicated region
  $region14: #{value_forward.1} parent=0 // pred_check
    _
  $region15: #{value_forward.1} parent=0 // pred_check_branch
    %20 = sbr.rel (0) target = $region17
  $region16: #{value_forward.1} parent=0 // pred_region
    _
  $region17: #{value_forward.1} parent=0 // pred_fallthru
    _
  // Predicated region
  $region18: #{value_forward.1} parent=0 // pred_check
    _
  $region19: #{value_forward.1} parent=0 // pred_check_branch
    %22 = sbr.rel (0) target = $region21
  $region20: #{value_forward.1} parent=0 // pred_region
    _
  $region21: #{value_forward.1} parent=0 // pred_fallthru
    _
  // Predicated region
  $region22: #{value_forward.1} parent=0 // pred_check
    _
  $region23: #{value_forward.1} parent=0 // pred_check_branch
    %24 = sbr.rel (0) target = $region25
  $region24: #{value_forward.1} parent=0 // pred_region
    _
  $region25: #{value_forward.1} parent=0 // pred_fallthru
    _
  // Predicated region
  $region26: #{value_forward.1} parent=0 // pred_check
    _
  $region27: #{value_forward.1} parent=0 // pred_check_branch
    %26 = sbr.rel (0) target = $region29
  $region28: #{value_forward.1} parent=0 // pred_region
    _
  $region29: #{value_forward.1} parent=0 // pred_fallthru
    _
  %v28 = vld [vmem:[%s1] sm:$0xf]
  %v29 = vld [vmem:[%s1 + $0x4] sm:$0xf]
  %v30 = vld [vmem:[%s1 + $0x8] sm:$0xf]
  %v31 = vld [vmem:[%s1 + $0xc] sm:$0xf]
  %v32 = vld [vmem:[%s2] sm:$0x1]
  %v33 = vld [vmem:[%s3] sm:$0xf]
  %v34 = vld [vmem:[%s3 + $0x4] sm:$0xf]
  %v35 = vld [vmem:[%s3 + $0x8] sm:$0xf]
  %v36 = vld [vmem:[%s3 + $0xc] sm:$0xf]
  %v37 = vld [vmem:[%s3 + $0x10] sm:$0xf]
  %v38 = vld [vmem:[%s3 + $0x14] sm:$0xf]
  %v39 = vld [vmem:[%s3 + $0x18] sm:$0xf]
  %v40 = vld [vmem:[%s3 + $0x1c] sm:$0xf]
  %v41 = vld [vmem:[%s3 + $0x20] sm:$0xf]
  %v42 = vld [vmem:[%s3 + $0x24] sm:$0xf]
  %v43 = vld [vmem:[%s3 + $0x28] sm:$0xf]
  %v44 = vld [vmem:[%s3 + $0x2c] sm:$0xf]
  %v45 = vld [vmem:[%s3 + $0x30] sm:$0xf]
  %v46 = vld [vmem:[%s3 + $0x34] sm:$0xf]
  %v47 = vld [vmem:[%s3 + $0x38] sm:$0xf]
  %v48 = vld [vmem:[%s3 + $0x3c] sm:$0xf]
  %v49 = vld [vmem:[%s4] sm:$0x1]
  %v50 = vld [vmem:[%s5] sm:$0x1]
  %s51 = sld [smem:[#allocation2]]
  %v52 = vld [vmem:[%s0] sm:$0xf]
  %v53 = vld [vmem:[%s0 + $0x4] sm:$0xf]
  %v54 = vld [vmem:[%s0 + $0x8] sm:$0xf]
  %v55 = vld [vmem:[%s0 + $0xc] sm:$0xf]
  %v56 = vld [vmem:[%s0 + $0x10] sm:$0xf]
  %v57 = vld [vmem:[%s0 + $0x14] sm:$0xf]
  %v58 = vld [vmem:[%s0 + $0x18] sm:$0xf]
  %v59 = vld [vmem:[%s0 + $0x1c] sm:$0xf]
  %v60 = vld [vmem:[%s0 + $0x20] sm:$0xf]
  %v61 = vld [vmem:[%s0 + $0x24] sm:$0xf]
  %v62 = vld [vmem:[%s0 + $0x28] sm:$0xf]
  %v63 = vld [vmem:[%s0 + $0x2c] sm:$0xf]
  %v64 = vld [vmem:[%s0 + $0x30] sm:$0xf]
  %v65 = vld [vmem:[%s0 + $0x34] sm:$0xf]
  %v66 = vld [vmem:[%s0 + $0x38] sm:$0xf]
  %v67 = vld [vmem:[%s0 + $0x3c] sm:$0xf]
  %v84 = vunpack.c.l.b16 %v52
  %v85 = vunpack.c.l.b16 %v53
  %v86 = vunpack.c.l.b16 %v54
  %v87 = vunpack.c.l.b16 %v55
  %v88 = vunpack.c.l.b16 %v56
  %v89 = vunpack.c.l.b16 %v57
  %v90 = vunpack.c.l.b16 %v58
  %v91 = vunpack.c.l.b16 %v59
  %v92 = vunpack.c.l.b16 %v60
  %v93 = vunpack.c.l.b16 %v61
  %v94 = vunpack.c.l.b16 %v62
  %v95 = vunpack.c.l.b16 %v63
  %v96 = vunpack.c.l.b16 %v64
  %v97 = vunpack.c.l.b16 %v65
  %v98 = vunpack.c.l.b16 %v66
  %v99 = vunpack.c.l.b16 %v67
  %v100 = vpack.c.b16 %v85, %v84
  %v101 = vpack.c.b16 %v87, %v86
  %v102 = vpack.c.b16 %v89, %v88
  %v103 = vpack.c.b16 %v91, %v90
  %v104 = vpack.c.b16 %v93, %v92
  %v105 = vpack.c.b16 %v95, %v94
  %v106 = vpack.c.b16 %v97, %v96
  %v107 = vpack.c.b16 %v99, %v98
  %v112 = vunpack.c.l.b16 %v28
  %v113 = vunpack.c.l.b16 %v29
  %v114 = vunpack.c.l.b16 %v30
  %v115 = vunpack.c.l.b16 %v31
  %v116 = vpack.c.b16 %v113, %v112
  %v117 = vpack.c.b16 %v115, %v114
  %vm120 = vcmask 261120
  %v122 = vsel %vm120, %v100, 0
  %v125 = vsel %vm120, %v101, 0
  %v128 = vsel %vm120, %v102, 0
  %v131 = vsel %vm120, %v103, 0
  %v134 = vsel %vm120, %v104, 0
  %v137 = vsel %vm120, %v105, 0
  %v140 = vsel %vm120, %v106, 0
  %v143 = vsel %vm120, %v107, 0
  %145 = vmatprep.subr.bf16.mxu0 0
  %146 = vmatpush1.bf16.msra.mxu0 %v116
  %147 = vmatprep.subr.bf16.mxu0 0
  %148 = vmatpush1.bf16.msra.mxu0 %v117
  %149 = vmatprep.subr.bf16.mxu0 0
  %150 = vmatpush1.bf16.msra.mxu0 0
  %151 = vmatprep.subr.bf16.mxu0 0
  %152 = vmatpush1.bf16.msra.mxu0 0
  %153 = vmatprep.subr.bf16.mxu0 0
  %154 = vmatpush1.bf16.msra.mxu0 0
  %155 = vmatprep.subr.bf16.mxu0 0
  %156 = vmatpush1.bf16.msra.mxu0 0
  %157 = vmatprep.subr.bf16.mxu0 0
  %158 = vmatpush1.bf16.msra.mxu0 0
  %159 = vmatprep.subr.bf16.mxu0 0
  %160 = vmatpush1.bf16.msra.mxu0 0
  %161 = vmatprep.subr.bf16.mxu0 0
  %162 = vmatpush1.bf16.msra.mxu0 0
  %163 = vmatprep.subr.bf16.mxu0 0
  %164 = vmatpush1.bf16.msra.mxu0 0
  %165 = vmatprep.subr.bf16.mxu0 0
  %166 = vmatpush1.bf16.msra.mxu0 0
  %167 = vmatprep.subr.bf16.mxu0 0
  %168 = vmatpush1.bf16.msra.mxu0 0
  %169 = vmatprep.subr.bf16.mxu0 0
  %170 = vmatpush1.bf16.msra.mxu0 0
  %171 = vmatprep.subr.bf16.mxu0 0
  %172 = vmatpush1.bf16.msra.mxu0 0
  %173 = vmatprep.subr.bf16.mxu0 0
  %174 = vmatpush1.bf16.msra.mxu0 0
  %175 = vmatprep.subr.bf16.mxu0 0
  %176 = vmatpush1.bf16.msra.mxu0 0
  %177 = vmatprep.mubr.bf16.mxu0 0
  %178 = vmatmul.mubr.bf16.gmra.mrb[0].mxu0 %v122
  %v179 = vpop.f32.mrb[0].mxu0
  %v180 = vadd.f32 0.0, %v179
  %v181 = vpop.f32.mrb[0].mxu0
  %v182 = vpop.f32.mrb[0].mxu0
  %v183 = vadd.f32 0.0, %v182
  %v184 = vpop.f32.mrb[0].mxu0
  %185 = vmatprep.mubr.bf16.mxu0 0
  %186 = vmatmul.mubr.bf16.gmra.mrb[0].mxu0 %v125
  %v187 = vpop.f32.mrb[0].mxu0
  %v188 = vadd.f32 0.0, %v187
  %v189 = vpop.f32.mrb[0].mxu0
  %v190 = vpop.f32.mrb[0].mxu0
  %v191 = vadd.f32 0.0, %v190
  %v192 = vpop.f32.mrb[0].mxu0
  %193 = vmatprep.mubr.bf16.mxu0 0
  %194 = vmatmul.mubr.bf16.gmra.mrb[0].mxu0 %v128
  %v195 = vpop.f32.mrb[0].mxu0
  %v196 = vadd.f32 0.0, %v195
  %v197 = vpop.f32.mrb[0].mxu0
  %v198 = vpop.f32.mrb[0].mxu0
  %v199 = vadd.f32 0.0, %v198
  %v200 = vpop.f32.mrb[0].mxu0
  %201 = vmatprep.mubr.bf16.mxu0 0
  %202 = vmatmul.mubr.bf16.gmra.mrb[0].mxu0 %v131
  %v203 = vpop.f32.mrb[0].mxu0
  %v204 = vadd.f32 0.0, %v203
  %v205 = vpop.f32.mrb[0].mxu0
  %v206 = vpop.f32.mrb[0].mxu0
  %v207 = vadd.f32 0.0, %v206
  %v208 = vpop.f32.mrb[0].mxu0
  %209 = vmatprep.mubr.bf16.mxu0 0
  %210 = vmatmul.mubr.bf16.gmra.mrb[0].mxu0 %v134
  %v211 = vpop.f32.mrb[0].mxu0
  %v212 = vadd.f32 0.0, %v211
  %v213 = vpop.f32.mrb[0].mxu0
  %v214 = vpop.f32.mrb[0].mxu0
  %v215 = vadd.f32 0.0, %v214
  %v216 = vpop.f32.mrb[0].mxu0
  %217 = vmatprep.mubr.bf16.mxu0 0
  %218 = vmatmul.mubr.bf16.gmra.mrb[0].mxu0 %v137
  %v219 = vpop.f32.mrb[0].mxu0
  %v220 = vadd.f32 0.0, %v219
  %v221 = vpop.f32.mrb[0].mxu0
  %v222 = vpop.f32.mrb[0].mxu0
  %v223 = vadd.f32 0.0, %v222
  %v224 = vpop.f32.mrb[0].mxu0
  %225 = vmatprep.mubr.bf16.mxu0 0
  %226 = vmatmul.mubr.bf16.gmra.mrb[0].mxu0 %v140
  %v227 = vpop.f32.mrb[0].mxu0
  %v228 = vadd.f32 0.0, %v227
  %v229 = vpop.f32.mrb[0].mxu0
  %v230 = vpop.f32.mrb[0].mxu0
  %v231 = vadd.f32 0.0, %v230
  %v232 = vpop.f32.mrb[0].mxu0
  %233 = vmatprep.mubr.bf16.mxu0 0
  %234 = vmatmul.mubr.bf16.gmra.mrb[0].mxu0 %v143
  %v235 = vpop.f32.mrb[0].mxu0
  %v236 = vadd.f32 0.0, %v235
  %v237 = vpop.f32.mrb[0].mxu0
  %v238 = vpop.f32.mrb[0].mxu0
  %v239 = vadd.f32 0.0, %v238
  %v240 = vpop.f32.mrb[0].mxu0
  %241 = vdwg.mxu0
  %v242 = vpack.c.bf16 %v183, %v180
  %v243 = vpack.c.bf16 %v191, %v188
  %v244 = vpack.c.bf16 %v199, %v196
  %v245 = vpack.c.bf16 %v207, %v204
  %v246 = vpack.c.bf16 %v215, %v212
  %v247 = vpack.c.bf16 %v223, %v220
  %v248 = vpack.c.bf16 %v231, %v228
  %v249 = vpack.c.bf16 %v239, %v236
  %v251 = vpack.i.b16 %v32, %v32
  %v253 = vlaneseq
  %v254 = vshrl.u32 %v253, 7
  %v255 = vsub.s32 0, %v254
  %v256 = vrot.slane %v251, %v255
  %v257 = vadd.bf16 %v242, %v256
  %v258 = vadd.bf16 %v243, %v256
  %v259 = vadd.bf16 %v244, %v256
  %v260 = vadd.bf16 %v245, %v256
  %v261 = vadd.bf16 %v246, %v256
  %v262 = vadd.bf16 %v247, %v256
  %v263 = vadd.bf16 %v248, %v256
  %v264 = vadd.bf16 %v249, %v256
  %v265 = vmax.bf16 %v257, 0
  %v266 = vmax.bf16 %v258, 0
  %v267 = vmax.bf16 %v259, 0
  %v268 = vmax.bf16 %v260, 0
  %v269 = vmax.bf16 %v261, 0
  %v270 = vmax.bf16 %v262, 0
  %v271 = vmax.bf16 %v263, 0
  %v272 = vmax.bf16 %v264, 0
  %v289 = vunpack.c.l.b16 %v33
  %v290 = vunpack.c.l.b16 %v34
  %v291 = vunpack.c.l.b16 %v35
  %v292 = vunpack.c.l.b16 %v36
  %v293 = vunpack.c.l.b16 %v37
  %v294 = vunpack.c.l.b16 %v38
  %v295 = vunpack.c.l.b16 %v39
  %v296 = vunpack.c.l.b16 %v40
  %v297 = vunpack.c.l.b16 %v41
  %v298 = vunpack.c.l.b16 %v42
  %v299 = vunpack.c.l.b16 %v43
  %v300 = vunpack.c.l.b16 %v44
  %v301 = vunpack.c.l.b16 %v45
  %v302 = vunpack.c.l.b16 %v46
  %v303 = vunpack.c.l.b16 %v47
  %v304 = vunpack.c.l.b16 %v48
  %v305 = vpack.c.b16 %v290, %v289
  %v306 = vpack.c.b16 %v292, %v291
  %v307 = vpack.c.b16 %v294, %v293
  %v308 = vpack.c.b16 %v296, %v295
  %v309 = vpack.c.b16 %v298, %v297
  %v310 = vpack.c.b16 %v300, %v299
  %v311 = vpack.c.b16 %v302, %v301
  %v312 = vpack.c.b16 %v304, %v303
  %321 = vmatprep.subr.bf16.mxu0 0
  %322 = vmatpush1.bf16.msra.mxu0 %v305
  %323 = vmatprep.subr.bf16.mxu0 0
  %324 = vmatpush1.bf16.msra.mxu0 %v306
  %325 = vmatprep.subr.bf16.mxu0 0
  %326 = vmatpush1.bf16.msra.mxu0 %v307
  %327 = vmatprep.subr.bf16.mxu0 0
  %328 = vmatpush1.bf16.msra.mxu0 %v308
  %329 = vmatprep.subr.bf16.mxu0 0
  %330 = vmatpush1.bf16.msra.mxu0 %v309
  %331 = vmatprep.subr.bf16.mxu0 0
  %332 = vmatpush1.bf16.msra.mxu0 %v310
  %333 = vmatprep.subr.bf16.mxu0 0
  %334 = vmatpush1.bf16.msra.mxu0 %v311
  %335 = vmatprep.subr.bf16.mxu0 0
  %336 = vmatpush1.bf16.msra.mxu0 %v312
  %337 = vmatprep.subr.bf16.mxu0 0
  %338 = vmatpush1.bf16.msra.mxu0 0
  %339 = vmatprep.subr.bf16.mxu0 0
  %340 = vmatpush1.bf16.msra.mxu0 0
  %341 = vmatprep.subr.bf16.mxu0 0
  %342 = vmatpush1.bf16.msra.mxu0 0
  %343 = vmatprep.subr.bf16.mxu0 0
  %344 = vmatpush1.bf16.msra.mxu0 0
  %345 = vmatprep.subr.bf16.mxu0 0
  %346 = vmatpush1.bf16.msra.mxu0 0
  %347 = vmatprep.subr.bf16.mxu0 0
  %348 = vmatpush1.bf16.msra.mxu0 0
  %349 = vmatprep.subr.bf16.mxu0 0
  %350 = vmatpush1.bf16.msra.mxu0 0
  %351 = vmatprep.subr.bf16.mxu0 0
  %352 = vmatpush1.bf16.msra.mxu0 0
  %353 = vmatprep.mubr.bf16.mxu0 0
  %354 = vmatmul.mubr.bf16.gmra.mrb[0].mxu0 %v265
  %v355 = vpop.f32.mrb[0].mxu0
  %v356 = vadd.f32 0.0, %v355
  %v357 = vpop.f32.mrb[0].mxu0
  %v358 = vpop.f32.mrb[0].mxu0
  %v359 = vadd.f32 0.0, %v358
  %v360 = vpop.f32.mrb[0].mxu0
  %361 = vmatprep.mubr.bf16.mxu0 0
  %362 = vmatmul.mubr.bf16.gmra.mrb[0].mxu0 %v266
  %v363 = vpop.f32.mrb[0].mxu0
  %v364 = vadd.f32 0.0, %v363
  %v365 = vpop.f32.mrb[0].mxu0
  %v366 = vpop.f32.mrb[0].mxu0
  %v367 = vadd.f32 0.0, %v366
  %v368 = vpop.f32.mrb[0].mxu0
  %369 = vmatprep.mubr.bf16.mxu0 0
  %370 = vmatmul.mubr.bf16.gmra.mrb[0].mxu0 %v267
  %v371 = vpop.f32.mrb[0].mxu0
  %v372 = vadd.f32 0.0, %v371
  %v373 = vpop.f32.mrb[0].mxu0
  %v374 = vpop.f32.mrb[0].mxu0
  %v375 = vadd.f32 0.0, %v374
  %v376 = vpop.f32.mrb[0].mxu0
  %377 = vmatprep.mubr.bf16.mxu0 0
  %378 = vmatmul.mubr.bf16.gmra.mrb[0].mxu0 %v268
  %v379 = vpop.f32.mrb[0].mxu0
  %v380 = vadd.f32 0.0, %v379
  %v381 = vpop.f32.mrb[0].mxu0
  %v382 = vpop.f32.mrb[0].mxu0
  %v383 = vadd.f32 0.0, %v382
  %v384 = vpop.f32.mrb[0].mxu0
  %385 = vmatprep.mubr.bf16.mxu0 0
  %386 = vmatmul.mubr.bf16.gmra.mrb[0].mxu0 %v269
  %v387 = vpop.f32.mrb[0].mxu0
  %v388 = vadd.f32 0.0, %v387
  %v389 = vpop.f32.mrb[0].mxu0
  %v390 = vpop.f32.mrb[0].mxu0
  %v391 = vadd.f32 0.0, %v390
  %v392 = vpop.f32.mrb[0].mxu0
  %393 = vmatprep.mubr.bf16.mxu0 0
  %394 = vmatmul.mubr.bf16.gmra.mrb[0].mxu0 %v270
  %v395 = vpop.f32.mrb[0].mxu0
  %v396 = vadd.f32 0.0, %v395
  %v397 = vpop.f32.mrb[0].mxu0
  %v398 = vpop.f32.mrb[0].mxu0
  %v399 = vadd.f32 0.0, %v398
  %v400 = vpop.f32.mrb[0].mxu0
  %401 = vmatprep.mubr.bf16.mxu0 0
  %402 = vmatmul.mubr.bf16.gmra.mrb[0].mxu0 %v271
  %v403 = vpop.f32.mrb[0].mxu0
  %v404 = vadd.f32 0.0, %v403
  %v405 = vpop.f32.mrb[0].mxu0
  %v406 = vpop.f32.mrb[0].mxu0
  %v407 = vadd.f32 0.0, %v406
  %v408 = vpop.f32.mrb[0].mxu0
  %409 = vmatprep.mubr.bf16.mxu0 0
  %410 = vmatmul.mubr.bf16.gmra.mrb[0].mxu0 %v272
  %v411 = vpop.f32.mrb[0].mxu0
  %v412 = vadd.f32 0.0, %v411
  %v413 = vpop.f32.mrb[0].mxu0
  %v414 = vpop.f32.mrb[0].mxu0
  %v415 = vadd.f32 0.0, %v414
  %v416 = vpop.f32.mrb[0].mxu0
  %417 = vdwg.mxu0
  %v418 = vpack.c.bf16 %v359, %v356
  %v419 = vpack.c.bf16 %v367, %v364
  %v420 = vpack.c.bf16 %v375, %v372
  %v421 = vpack.c.bf16 %v383, %v380
  %v422 = vpack.c.bf16 %v391, %v388
  %v423 = vpack.c.bf16 %v399, %v396
  %v424 = vpack.c.bf16 %v407, %v404
  %v425 = vpack.c.bf16 %v415, %v412
  %v427 = vpack.i.b16 %v49, %v49
  %v429 = vlaneseq
  %v430 = vshrl.u32 %v429, 7
  %v431 = vsub.s32 0, %v430
  %v432 = vrot.slane %v427, %v431
  %v433 = vadd.bf16 %v418, %v432
  %v434 = vadd.bf16 %v419, %v432
  %v435 = vadd.bf16 %v420, %v432
  %v436 = vadd.bf16 %v421, %v432
  %v437 = vadd.bf16 %v422, %v432
  %v438 = vadd.bf16 %v423, %v432
  %v439 = vadd.bf16 %v424, %v432
  %v440 = vadd.bf16 %v425, %v432
  %v441 = vmax.bf16 %v433, 0
  %v442 = vmax.bf16 %v434, 0
  %v443 = vmax.bf16 %v435, 0
  %v444 = vmax.bf16 %v436, 0
  %v445 = vmax.bf16 %v437, 0
  %v446 = vmax.bf16 %v438, 0
  %v447 = vmax.bf16 %v439, 0
  %v448 = vmax.bf16 %v440, 0
  %v450 = vpack.i.b16 %v50, %v50
  %v452 = vlaneseq
  %v453 = vshrl.u32 %v452, 7
  %v454 = vsub.s32 0, %v453
  %v455 = vrot.slane %v450, %v454
  %v456 = vmul.bf16 %v441, %v455
  %v457 = vmul.bf16 %v442, %v455
  %v458 = vmul.bf16 %v443, %v455
  %v459 = vmul.bf16 %v444, %v455
  %v460 = vmul.bf16 %v445, %v455
  %v461 = vmul.bf16 %v446, %v455
  %v462 = vmul.bf16 %v447, %v455
  %v463 = vmul.bf16 %v448, %v455
  %v464 = vunpack.c.l.bf16 %v456
  %v465 = vunpack.c.h.bf16 %v456
  %v466 = vunpack.c.l.bf16 %v457
  %v467 = vunpack.c.h.bf16 %v457
  %v468 = vunpack.c.l.bf16 %v458
  %v469 = vunpack.c.h.bf16 %v458
  %v470 = vunpack.c.l.bf16 %v459
  %v471 = vunpack.c.h.bf16 %v459
  %v472 = vunpack.c.l.bf16 %v460
  %v473 = vunpack.c.h.bf16 %v460
  %v474 = vunpack.c.l.bf16 %v461
  %v475 = vunpack.c.h.bf16 %v461
  %v476 = vunpack.c.l.bf16 %v462
  %v477 = vunpack.c.h.bf16 %v462
  %v478 = vunpack.c.l.bf16 %v463
  %v479 = vunpack.c.h.bf16 %v463
  %480 = vadd.xlane.f32.xlu0 %v464
  %v481 = vpop.xlane.xlu0 %480
  %482 = vadd.xlane.f32.xlu0 %v465
  %v483 = vpop.xlane.xlu0 %482
  %484 = vadd.xlane.f32.xlu0 %v466
  %v485 = vpop.xlane.xlu0 %484
  %486 = vadd.xlane.f32.xlu0 %v467
  %v487 = vpop.xlane.xlu0 %486
  %488 = vadd.xlane.f32.xlu0 %v468
  %v489 = vpop.xlane.xlu0 %488
  %490 = vadd.xlane.f32.xlu0 %v469
  %v491 = vpop.xlane.xlu0 %490
  %492 = vadd.xlane.f32.xlu0 %v470
  %v493 = vpop.xlane.xlu0 %492
  %494 = vadd.xlane.f32.xlu0 %v471
  %v495 = vpop.xlane.xlu0 %494
  %496 = vadd.xlane.f32.xlu0 %v472
  %v497 = vpop.xlane.xlu0 %496
  %498 = vadd.xlane.f32.xlu0 %v473
  %v499 = vpop.xlane.xlu0 %498
  %500 = vadd.xlane.f32.xlu0 %v474
  %v501 = vpop.xlane.xlu0 %500
  %502 = vadd.xlane.f32.xlu0 %v475
  %v503 = vpop.xlane.xlu0 %502
  %504 = vadd.xlane.f32.xlu0 %v476
  %v505 = vpop.xlane.xlu0 %504
  %506 = vadd.xlane.f32.xlu0 %v477
  %v507 = vpop.xlane.xlu0 %506
  %508 = vadd.xlane.f32.xlu0 %v478
  %v509 = vpop.xlane.xlu0 %508
  %510 = vadd.xlane.f32.xlu0 %v479
  %v511 = vpop.xlane.xlu0 %510
  %v512 = vstv %s51
  %v513 = vadd.f32 %v481, %v512
  %v514 = vadd.f32 %v483, %v512
  %v515 = vadd.f32 %v485, %v512
  %v516 = vadd.f32 %v487, %v512
  %v517 = vadd.f32 %v489, %v512
  %v518 = vadd.f32 %v491, %v512
  %v519 = vadd.f32 %v493, %v512
  %v520 = vadd.f32 %v495, %v512
  %v521 = vadd.f32 %v497, %v512
  %v522 = vadd.f32 %v499, %v512
  %v523 = vadd.f32 %v501, %v512
  %v524 = vadd.f32 %v503, %v512
  %v525 = vadd.f32 %v505, %v512
  %v526 = vadd.f32 %v507, %v512
  %v527 = vadd.f32 %v509, %v512
  %v528 = vadd.f32 %v511, %v512
  %v545 = vlaneseq
  %v546 = vand.u32 %v545, 127
  %v547 = vlaneseq
  %v548 = vshrl.u32 %v547, 7
  %v549 = vsub.s32 %v546, %v548
  %v550 = vrot.slane %v513, %v549
  %v551 = vadd.s32 %v546, 4294967288
  %v552 = vlaneseq
  %v553 = vshrl.u32 %v552, 7
  %v554 = vsub.s32 %v551, %v553
  %v555 = vrot.slane %v514, %v554
  %vm556 = vcmask 130112
  %v557 = vsel %vm556, %v555, %v550
  %v558 = vadd.s32 %v546, 4294967280
  %v559 = vlaneseq
  %v560 = vshrl.u32 %v559, 7
  %v561 = vsub.s32 %v558, %v560
  %v562 = vrot.slane %v515, %v561
  %vm563 = vcmask 195712
  %v564 = vsel %vm563, %v562, %v557
  %v565 = vadd.s32 %v546, 4294967272
  %v566 = vlaneseq
  %v567 = vshrl.u32 %v566, 7
  %v568 = vsub.s32 %v565, %v567
  %v569 = vrot.slane %v516, %v568
  %vm570 = vcmask 261312
  %v571 = vsel %vm570, %v569, %v564
  %v572 = vadd.s32 %v546, 4294967264
  %v573 = vlaneseq
  %v574 = vshrl.u32 %v573, 7
  %v575 = vsub.s32 %v572, %v574
  %v576 = vrot.slane %v517, %v575
  %vm577 = vcmask 326912
  %v578 = vsel %vm577, %v576, %v571
  %v579 = vadd.s32 %v546, 4294967256
  %v580 = vlaneseq
  %v581 = vshrl.u32 %v580, 7
  %v582 = vsub.s32 %v579, %v581
  %v583 = vrot.slane %v518, %v582
  %vm584 = vcmask 392512
  %v585 = vsel %vm584, %v583, %v578
  %v586 = vadd.s32 %v546, 4294967248
  %v587 = vlaneseq
  %v588 = vshrl.u32 %v587, 7
  %v589 = vsub.s32 %v586, %v588
  %v590 = vrot.slane %v519, %v589
  %vm591 = vcmask 458112
  %v592 = vsel %vm591, %v590, %v585
  %v593 = vadd.s32 %v546, 4294967240
  %v594 = vlaneseq
  %v595 = vshrl.u32 %v594, 7
  %v596 = vsub.s32 %v593, %v595
  %v597 = vrot.slane %v520, %v596
  %vm598 = vcmask 523712
  %v599 = vsel %vm598, %v597, %v592
  %v600 = vadd.s32 %v546, 4294967232
  %v601 = vlaneseq
  %v602 = vshrl.u32 %v601, 7
  %v603 = vsub.s32 %v600, %v602
  %v604 = vrot.slane %v521, %v603
  %vm605 = vcmask 589312
  %v606 = vsel %vm605, %v604, %v599
  %v607 = vadd.s32 %v546, 4294967224
  %v608 = vlaneseq
  %v609 = vshrl.u32 %v608, 7
  %v610 = vsub.s32 %v607, %v609
  %v611 = vrot.slane %v522, %v610
  %vm612 = vcmask 654912
  %v613 = vsel %vm612, %v611, %v606
  %v614 = vadd.s32 %v546, 4294967216
  %v615 = vlaneseq
  %v616 = vshrl.u32 %v615, 7
  %v617 = vsub.s32 %v614, %v616
  %v618 = vrot.slane %v523, %v617
  %vm619 = vcmask 720512
  %v620 = vsel %vm619, %v618, %v613
  %v621 = vadd.s32 %v546, 4294967208
  %v622 = vlaneseq
  %v623 = vshrl.u32 %v622, 7
  %v624 = vsub.s32 %v621, %v623
  %v625 = vrot.slane %v524, %v624
  %vm626 = vcmask 786112
  %v627 = vsel %vm626, %v625, %v620
  %v628 = vadd.s32 %v546, 4294967200
  %v629 = vlaneseq
  %v630 = vshrl.u32 %v629, 7
  %v631 = vsub.s32 %v628, %v630
  %v632 = vrot.slane %v525, %v631
  %vm633 = vcmask 851712
  %v634 = vsel %vm633, %v632, %v627
  %v635 = vadd.s32 %v546, 4294967192
  %v636 = vlaneseq
  %v637 = vshrl.u32 %v636, 7
  %v638 = vsub.s32 %v635, %v637
  %v639 = vrot.slane %v526, %v638
  %vm640 = vcmask 917312
  %v641 = vsel %vm640, %v639, %v634
  %v642 = vadd.s32 %v546, 4294967184
  %v643 = vlaneseq
  %v644 = vshrl.u32 %v643, 7
  %v645 = vsub.s32 %v642, %v644
  %v646 = vrot.slane %v527, %v645
  %vm647 = vcmask 982912
  %v648 = vsel %vm647, %v646, %v641
  %v649 = vadd.s32 %v546, 4294967176
  %v650 = vlaneseq
  %v651 = vshrl.u32 %v650, 7
  %v652 = vsub.s32 %v649, %v651
  %v653 = vrot.slane %v528, %v652
  %vm654 = vcmask 1048512
  %v655 = vsel %vm654, %v653, %v648
  %657 = vst [vmem:[%s7] sm:$0x1] %v655
  // Predicated region
  $region30: #{value_forward.1} parent=0 // pred_check
    _
  $region31: #{value_forward.1} parent=0 // pred_check_branch
    %659 = sbr.rel (0) target = $region33
  $region32: #{value_forward.1} parent=0 // pred_region
    _
  $region33: #{value_forward.1} parent=0 // pred_fallthru
    _
  // Predicated region
  $region34: #{value_forward.1} parent=0 // pred_check
    _
  $region35: #{value_forward.1} parent=0 // pred_check_branch
    %661 = sbr.rel (0) target = $region37
  $region36: #{value_forward.1} parent=0 // pred_region
    _
  $region37: #{value_forward.1} parent=0 // pred_fallthru
    _

</llo_original>
